<compile_context>
chip_gen: v6e
topology: v6e:2x2x1
jax: 0.10.0
libtpu: 0.0.40
codegen_flags: <defaults>
</compile_context>

<pallas_src>
import jax
import jax.numpy as jnp
from jax.experimental import pallas as pl
from jax.experimental.pallas import tpu as pltpu

BN_EPS = 1e-5


def _make_kernel(H, W, nb):
    """Kernel closure for a fixed image size and per-step batch block `nb`."""
    HW = H * W
    # tap t = kh*3 + kw wants x_flat[p + (kh-1)*W + (kw-1)]  ==  roll(x_flat, -shift)[p]
    roll_shifts = tuple((-((kh - 1) * W + (kw - 1))) % HW
                        for kh in range(3) for kw in range(3))

    def kernel(x_ref, w_ref, m_ref, b_ref, o_ref):
        # x_ref: (nb, Cin, HW)   producer dtype (f32 here) — cast to bf16 in-kernel
        # w_ref: (9, Cout, Cin)  bf16  BN-scale-folded weights, tap-major
        # m_ref: (9, HW)         f32   0/1 boundary-validity masks per tap
        # b_ref: (Cout, 1)       f32   folded BN bias
        # o_ref: (nb, Cout, HW)  bf16  flattened NCHW output block
        cout = w_ref.shape[1]

        wmat = w_ref[...]                                        # (9, Cout, Cin) bf16
        masks = m_ref[...]                                       # (9, HW) f32
        bias_full = jnp.broadcast_to(b_ref[...], (cout, HW))     # hoisted: one broadcast / step

        def process(b):
            xb = x_ref[b].astype(jnp.float32)                    # (Cin, HW)
            acc = bias_full                                      # start from the folded BN bias
            for t in range(9):                                   # 9 taps, static unroll
                # XLU lane rotation + multiplicative boundary mask (no padded buffer).
                tap = pltpu.roll(xb, shift=roll_shifts[t], axis=1) * masks[t:t + 1]
                acc = acc + jnp.dot(wmat[t], tap.astype(jnp.bfloat16),
                                    preferred_element_type=jnp.float32)
            o_ref[b] = jnp.maximum(acc, 0.0).astype(o_ref.dtype)  # ReLU, lane-dense bf16 store

        if nb <= 8:
            for b in range(nb):              # small, bounded static unroll
                process(b)
        else:
            def body(b, carry):              # bounded code size / live ranges for large nb
                process(b)
                return carry
            jax.lax.fori_loop(0, nb, body, 0)

    return kernel


def basic_block_forward(x_nchw, weight, gamma, beta, running_mean, running_var,
                        *, out_dtype=jnp.bfloat16, batch_block=None):
    """BasicBlock forward. x_nchw: (N, Cin, H, W). weight: (Cout, Cin, 3, 3)."""
    N, Cin, H, W = x_nchw.shape
    Cout = weight.shape[0]
    HW = H * W

    # ---- Fold inference BatchNorm into conv weights / bias (one-time wrapper cost) ----
    scale = gamma.astype(jnp.float32) / jnp.sqrt(running_var.astype(jnp.float32) + BN_EPS)
    w_scaled = weight.astype(jnp.float32) * scale[:, None, None, None]         # (Cout, Cin, 3, 3)
    w_taps = jnp.transpose(w_scaled, (2, 3, 0, 1)).reshape(9, Cout, Cin).astype(jnp.bfloat16)
    bias = (beta.astype(jnp.float32) - running_mean.astype(jnp.float32) * scale).reshape(Cout, 1)

    # ---- Precompute per-tap boundary masks once (tiny constant input, not rebuilt per step) ----
    p = jnp.arange(HW, dtype=jnp.int32)
    row, col = p // W, p % W
    masks = []
    for kh in range(3):
        for kw in range(3):
            dh, dw = kh - 1, kw - 1
            valid = ((row + dh >= 0) & (row + dh <= H - 1) &
                     (col + dw >= 0) & (col + dw <= W - 1))
            masks.append(valid)
    mask_arr = jnp.stack(masks, axis=0).astype(jnp.float32)                    # (9, HW)

    # ---- Keep producer dtype; flatten spatial dims (free reshape), cast happens in-kernel ----
    x_flat = x_nchw.reshape(N, Cin, HW)

    # ---- Per-step batch block: ~8 MiB of in+out traffic, but keep >= 2 grid steps (v7x 2 TCs) ----
    out_itemsize = jnp.dtype(out_dtype).itemsize
    per_image = Cin * HW * x_flat.dtype.itemsize + Cout * HW * out_itemsize
    if batch_block is None:
        nb = max(1, min(N, (8 << 20) // max(per_image, 1)))
        if N >= 2:
            nb = min(nb, pl.cdiv(N, 2))
    else:
        nb = batch_block
    grid = (pl.cdiv(N, nb),)   # ceil-div grid: partial trailing block handled by Pallas

    # Explicit VMEM budget: double-buffered in/out blocks + weights/masks + temp headroom,
    # clamped to stay comfortably inside v7x's 64 MiB physical VMEM.
    block_bytes = nb * per_image
    small = w_taps.size * 2 + mask_arr.size * 4 + Cout * 4
    vmem_limit = int(min(48 << 20, max(16 << 20, 2 * block_bytes + small + (4 << 20))))

    kernel = _make_kernel(H, W, nb)

    out_flat = pl.pallas_call(
        kernel,
        out_shape=jax.ShapeDtypeStruct((N, Cout, HW), out_dtype),
        grid_spec=pltpu.PrefetchScalarGridSpec(
            num_scalar_prefetch=0,
            grid=grid,
            in_specs=[
                pl.BlockSpec((nb, Cin, HW), lambda n: (n, 0, 0)),
                pl.BlockSpec((9, Cout, Cin), lambda n: (0, 0, 0)),
                pl.BlockSpec((9, HW), lambda n: (0, 0)),
                pl.BlockSpec((Cout, 1), lambda n: (0, 0)),
            ],
            out_specs=pl.BlockSpec((nb, Cout, HW), lambda n: (n, 0, 0)),
        ),
        compiler_params=pltpu.CompilerParams(
            dimension_semantics=("parallel",),
            vmem_limit_bytes=vmem_limit),
    )(x_flat, w_taps, mask_arr, bias)

    # Free reshape straight back to NCHW (no transpose pass).
    return out_flat.reshape(N, Cout, H, W)


def _reference_forward(x_nchw, weight, gamma, beta, running_mean, running_var):
    """Pure-JAX f32 reference (conv + BN(eval) + ReLU) matching the PyTorch module."""
    y = jax.lax.conv_general_dilated(
        x_nchw.astype(jnp.float32), weight.astype(jnp.float32),
        window_strides=(1, 1), padding=((1, 1), (1, 1)),
        dimension_numbers=("NCHW", "OIHW", "NCHW"))
    inv_std = 1.0 / jnp.sqrt(running_var + BN_EPS)
    y = (y - running_mean[None, :, None, None]) * inv_std[None, :, None, None]
    y = y * gamma[None, :, None, None] + beta[None, :, None, None]
    return jnp.maximum(y, 0.0)


if __name__ == "__main__":
    key = jax.random.PRNGKey(0)
    k_x, k_w, k_g, k_b, k_m, k_v = jax.random.split(key, 6)

    N, Cin, Cout, H, W = 2, 4, 8, 16, 16

    x = jax.random.normal(k_x, (N, Cin, H, W), dtype=jnp.float32)
    weight = jax.random.normal(k_w, (Cout, Cin, 3, 3), dtype=jnp.float32) * 0.1
    gamma = 1.0 + 0.1 * jax.random.normal(k_g, (Cout,), dtype=jnp.float32)
    beta = 0.1 * jax.random.normal(k_b, (Cout,), dtype=jnp.float32)
    running_mean = 0.05 * jax.random.normal(k_m, (Cout,), dtype=jnp.float32)
    running_var = jnp.abs(1.0 + 0.1 * jax.random.normal(k_v, (Cout,), dtype=jnp.float32))

    out = basic_block_forward(x, weight, gamma, beta, running_mean, running_var)
    out = jax.block_until_ready(out)

    ref = _reference_forward(x, weight, gamma, beta, running_mean, running_var)
    assert out.shape == (N, Cout, H, W), out.shape
    out_f32 = out.astype(jnp.float32)
    max_err = float(jnp.max(jnp.abs(out_f32 - ref)))
    # bf16 MXU operands + bf16 output -> relaxed tolerance vs. the f32 reference.
    assert jnp.allclose(out_f32, ref, atol=3e-2, rtol=3e-2), max_err

    print("KERNEL_OK")
</pallas_src>

<mosaic_0001>
module attributes {stable_mosaic.version = 11 : i64} {
  func.func @kernel(%arg0: i32, %arg1: memref<1x4x256xf32, #tpu.memory_space<vmem>>, %arg2: memref<9x8x4xbf16, #tpu.memory_space<vmem>>, %arg3: memref<9x256xf32, #tpu.memory_space<vmem>>, %arg4: memref<8x1xf32, #tpu.memory_space<vmem>>, %arg5: memref<1x8x256xbf16, #tpu.memory_space<vmem>>) attributes {dimension_semantics = [#tpu.dimension_semantics<parallel>], iteration_bounds = array<i64: 2>, scalar_prefetch = 0 : i64, scratch_operands = 0 : i64, tpu.core_type = #tpu.core_type<tc>, window_params = [{transform_indices = @transform_0, window_bounds = array<i64: 1, 4, 256>}, {pipeline_mode = #tpu.pipeline_mode<synchronous>, transform_indices = @transform_1, window_bounds = array<i64: 9, 8, 4>}, {pipeline_mode = #tpu.pipeline_mode<synchronous>, transform_indices = @transform_2, window_bounds = array<i64: 9, 256>}, {pipeline_mode = #tpu.pipeline_mode<synchronous>, transform_indices = @transform_3, window_bounds = array<i64: 8, 1>}, {transform_indices = @transform_4, window_bounds = array<i64: 1, 8, 256>}]} {
    %c0 = arith.constant 0 : index
    %c0_0 = arith.constant 0 : index
    %c0_1 = arith.constant 0 : index
    %0 = vector.load %arg2[%c0, %c0_0, %c0_1] : memref<9x8x4xbf16, #tpu.memory_space<vmem>>, vector<9x8x4xbf16>
    %c0_2 = arith.constant 0 : index
    %c0_3 = arith.constant 0 : index
    %1 = vector.load %arg3[%c0_2, %c0_3] : memref<9x256xf32, #tpu.memory_space<vmem>>, vector<9x256xf32>
    %c0_4 = arith.constant 0 : index
    %c0_5 = arith.constant 0 : index
    %2 = vector.load %arg4[%c0_4, %c0_5] : memref<8x1xf32, #tpu.memory_space<vmem>>, vector<8x1xf32>
    %3 = vector.shape_cast %2 : vector<8x1xf32> to vector<8x1xf32>
    %4 = vector.broadcast %3 : vector<8x1xf32> to vector<8x256xf32>
    %c0_6 = arith.constant 0 : index
    %c0_7 = arith.constant 0 : index
    %c0_8 = arith.constant 0 : index
    %5 = vector.load %arg1[%c0_6, %c0_7, %c0_8] : memref<1x4x256xf32, #tpu.memory_space<vmem>>, vector<1x4x256xf32>
    %6 = vector.shape_cast %5 : vector<1x4x256xf32> to vector<4x256xf32>
    %c17_i32 = arith.constant 17 : i32
    %7 = tpu.dynamic_rotate %6 by %c17_i32 dim 1 : vector<4x256xf32>, i32 -> vector<4x256xf32>
    %8 = vector.extract_strided_slice %1 {offsets = [0, 0], sizes = [1, 256], strides = [1, 1]} : vector<9x256xf32> to vector<1x256xf32>
    %9 = vector.broadcast %8 : vector<1x256xf32> to vector<4x256xf32>
    %10 = arith.mulf %7, %9 : vector<4x256xf32>
    %11 = vector.extract_strided_slice %0 {offsets = [0, 0, 0], sizes = [1, 8, 4], strides = [1, 1, 1]} : vector<9x8x4xbf16> to vector<1x8x4xbf16>
    %12 = vector.shape_cast %11 : vector<1x8x4xbf16> to vector<8x4xbf16>
    %13 = arith.truncf %10 : vector<4x256xf32> to vector<4x256xbf16>
    %cst = arith.constant dense<0.000000e+00> : vector<8x256xf32>
    %14 = tpu.matmul %12, %13, %cst {dimension_numbers = #tpu.dot_dimension_numbers<[1], [0], [0], [1], [0, 0, 1, 1], [], []>} : vector<8x4xbf16>, vector<4x256xbf16>, vector<8x256xf32> -> vector<8x256xf32>
    %15 = arith.addf %4, %14 : vector<8x256xf32>
    %c16_i32 = arith.constant 16 : i32
    %16 = tpu.dynamic_rotate %6 by %c16_i32 dim 1 : vector<4x256xf32>, i32 -> vector<4x256xf32>
    %17 = vector.extract_strided_slice %1 {offsets = [1, 0], sizes = [1, 256], strides = [1, 1]} : vector<9x256xf32> to vector<1x256xf32>
    %18 = vector.broadcast %17 : vector<1x256xf32> to vector<4x256xf32>
    %19 = arith.mulf %16, %18 : vector<4x256xf32>
    %20 = vector.extract_strided_slice %0 {offsets = [1, 0, 0], sizes = [1, 8, 4], strides = [1, 1, 1]} : vector<9x8x4xbf16> to vector<1x8x4xbf16>
    %21 = vector.shape_cast %20 : vector<1x8x4xbf16> to vector<8x4xbf16>
    %22 = arith.truncf %19 : vector<4x256xf32> to vector<4x256xbf16>
    %cst_9 = arith.constant dense<0.000000e+00> : vector<8x256xf32>
    %23 = tpu.matmul %21, %22, %cst_9 {dimension_numbers = #tpu.dot_dimension_numbers<[1], [0], [0], [1], [0, 0, 1, 1], [], []>} : vector<8x4xbf16>, vector<4x256xbf16>, vector<8x256xf32> -> vector<8x256xf32>
    %24 = arith.addf %15, %23 : vector<8x256xf32>
    %c15_i32 = arith.constant 15 : i32
    %25 = tpu.dynamic_rotate %6 by %c15_i32 dim 1 : vector<4x256xf32>, i32 -> vector<4x256xf32>
    %26 = vector.extract_strided_slice %1 {offsets = [2, 0], sizes = [1, 256], strides = [1, 1]} : vector<9x256xf32> to vector<1x256xf32>
    %27 = vector.broadcast %26 : vector<1x256xf32> to vector<4x256xf32>
    %28 = arith.mulf %25, %27 : vector<4x256xf32>
    %29 = vector.extract_strided_slice %0 {offsets = [2, 0, 0], sizes = [1, 8, 4], strides = [1, 1, 1]} : vector<9x8x4xbf16> to vector<1x8x4xbf16>
    %30 = vector.shape_cast %29 : vector<1x8x4xbf16> to vector<8x4xbf16>
    %31 = arith.truncf %28 : vector<4x256xf32> to vector<4x256xbf16>
    %cst_10 = arith.constant dense<0.000000e+00> : vector<8x256xf32>
    %32 = tpu.matmul %30, %31, %cst_10 {dimension_numbers = #tpu.dot_dimension_numbers<[1], [0], [0], [1], [0, 0, 1, 1], [], []>} : vector<8x4xbf16>, vector<4x256xbf16>, vector<8x256xf32> -> vector<8x256xf32>
    %33 = arith.addf %24, %32 : vector<8x256xf32>
    %c1_i32 = arith.constant 1 : i32
    %34 = tpu.dynamic_rotate %6 by %c1_i32 dim 1 : vector<4x256xf32>, i32 -> vector<4x256xf32>
    %35 = vector.extract_strided_slice %1 {offsets = [3, 0], sizes = [1, 256], strides = [1, 1]} : vector<9x256xf32> to vector<1x256xf32>
    %36 = vector.broadcast %35 : vector<1x256xf32> to vector<4x256xf32>
    %37 = arith.mulf %34, %36 : vector<4x256xf32>
    %38 = vector.extract_strided_slice %0 {offsets = [3, 0, 0], sizes = [1, 8, 4], strides = [1, 1, 1]} : vector<9x8x4xbf16> to vector<1x8x4xbf16>
    %39 = vector.shape_cast %38 : vector<1x8x4xbf16> to vector<8x4xbf16>
    %40 = arith.truncf %37 : vector<4x256xf32> to vector<4x256xbf16>
    %cst_11 = arith.constant dense<0.000000e+00> : vector<8x256xf32>
    %41 = tpu.matmul %39, %40, %cst_11 {dimension_numbers = #tpu.dot_dimension_numbers<[1], [0], [0], [1], [0, 0, 1, 1], [], []>} : vector<8x4xbf16>, vector<4x256xbf16>, vector<8x256xf32> -> vector<8x256xf32>
    %42 = arith.addf %33, %41 : vector<8x256xf32>
    %c0_i32 = arith.constant 0 : i32
    %43 = tpu.dynamic_rotate %6 by %c0_i32 dim 1 : vector<4x256xf32>, i32 -> vector<4x256xf32>
    %44 = vector.extract_strided_slice %1 {offsets = [4, 0], sizes = [1, 256], strides = [1, 1]} : vector<9x256xf32> to vector<1x256xf32>
    %45 = vector.broadcast %44 : vector<1x256xf32> to vector<4x256xf32>
    %46 = arith.mulf %43, %45 : vector<4x256xf32>
    %47 = vector.extract_strided_slice %0 {offsets = [4, 0, 0], sizes = [1, 8, 4], strides = [1, 1, 1]} : vector<9x8x4xbf16> to vector<1x8x4xbf16>
    %48 = vector.shape_cast %47 : vector<1x8x4xbf16> to vector<8x4xbf16>
    %49 = arith.truncf %46 : vector<4x256xf32> to vector<4x256xbf16>
    %cst_12 = arith.constant dense<0.000000e+00> : vector<8x256xf32>
    %50 = tpu.matmul %48, %49, %cst_12 {dimension_numbers = #tpu.dot_dimension_numbers<[1], [0], [0], [1], [0, 0, 1, 1], [], []>} : vector<8x4xbf16>, vector<4x256xbf16>, vector<8x256xf32> -> vector<8x256xf32>
    %51 = arith.addf %42, %50 : vector<8x256xf32>
    %c255_i32 = arith.constant 255 : i32
    %52 = tpu.dynamic_rotate %6 by %c255_i32 dim 1 : vector<4x256xf32>, i32 -> vector<4x256xf32>
    %53 = vector.extract_strided_slice %1 {offsets = [5, 0], sizes = [1, 256], strides = [1, 1]} : vector<9x256xf32> to vector<1x256xf32>
    %54 = vector.broadcast %53 : vector<1x256xf32> to vector<4x256xf32>
    %55 = arith.mulf %52, %54 : vector<4x256xf32>
    %56 = vector.extract_strided_slice %0 {offsets = [5, 0, 0], sizes = [1, 8, 4], strides = [1, 1, 1]} : vector<9x8x4xbf16> to vector<1x8x4xbf16>
    %57 = vector.shape_cast %56 : vector<1x8x4xbf16> to vector<8x4xbf16>
    %58 = arith.truncf %55 : vector<4x256xf32> to vector<4x256xbf16>
    %cst_13 = arith.constant dense<0.000000e+00> : vector<8x256xf32>
    %59 = tpu.matmul %57, %58, %cst_13 {dimension_numbers = #tpu.dot_dimension_numbers<[1], [0], [0], [1], [0, 0, 1, 1], [], []>} : vector<8x4xbf16>, vector<4x256xbf16>, vector<8x256xf32> -> vector<8x256xf32>
    %60 = arith.addf %51, %59 : vector<8x256xf32>
    %c241_i32 = arith.constant 241 : i32
    %61 = tpu.dynamic_rotate %6 by %c241_i32 dim 1 : vector<4x256xf32>, i32 -> vector<4x256xf32>
    %62 = vector.extract_strided_slice %1 {offsets = [6, 0], sizes = [1, 256], strides = [1, 1]} : vector<9x256xf32> to vector<1x256xf32>
    %63 = vector.broadcast %62 : vector<1x256xf32> to vector<4x256xf32>
    %64 = arith.mulf %61, %63 : vector<4x256xf32>
    %65 = vector.extract_strided_slice %0 {offsets = [6, 0, 0], sizes = [1, 8, 4], strides = [1, 1, 1]} : vector<9x8x4xbf16> to vector<1x8x4xbf16>
    %66 = vector.shape_cast %65 : vector<1x8x4xbf16> to vector<8x4xbf16>
    %67 = arith.truncf %64 : vector<4x256xf32> to vector<4x256xbf16>
    %cst_14 = arith.constant dense<0.000000e+00> : vector<8x256xf32>
    %68 = tpu.matmul %66, %67, %cst_14 {dimension_numbers = #tpu.dot_dimension_numbers<[1], [0], [0], [1], [0, 0, 1, 1], [], []>} : vector<8x4xbf16>, vector<4x256xbf16>, vector<8x256xf32> -> vector<8x256xf32>
    %69 = arith.addf %60, %68 : vector<8x256xf32>
    %c240_i32 = arith.constant 240 : i32
    %70 = tpu.dynamic_rotate %6 by %c240_i32 dim 1 : vector<4x256xf32>, i32 -> vector<4x256xf32>
    %71 = vector.extract_strided_slice %1 {offsets = [7, 0], sizes = [1, 256], strides = [1, 1]} : vector<9x256xf32> to vector<1x256xf32>
    %72 = vector.broadcast %71 : vector<1x256xf32> to vector<4x256xf32>
    %73 = arith.mulf %70, %72 : vector<4x256xf32>
    %74 = vector.extract_strided_slice %0 {offsets = [7, 0, 0], sizes = [1, 8, 4], strides = [1, 1, 1]} : vector<9x8x4xbf16> to vector<1x8x4xbf16>
    %75 = vector.shape_cast %74 : vector<1x8x4xbf16> to vector<8x4xbf16>
    %76 = arith.truncf %73 : vector<4x256xf32> to vector<4x256xbf16>
    %cst_15 = arith.constant dense<0.000000e+00> : vector<8x256xf32>
    %77 = tpu.matmul %75, %76, %cst_15 {dimension_numbers = #tpu.dot_dimension_numbers<[1], [0], [0], [1], [0, 0, 1, 1], [], []>} : vector<8x4xbf16>, vector<4x256xbf16>, vector<8x256xf32> -> vector<8x256xf32>
    %78 = arith.addf %69, %77 : vector<8x256xf32>
    %c239_i32 = arith.constant 239 : i32
    %79 = tpu.dynamic_rotate %6 by %c239_i32 dim 1 : vector<4x256xf32>, i32 -> vector<4x256xf32>
    %80 = vector.extract_strided_slice %1 {offsets = [8, 0], sizes = [1, 256], strides = [1, 1]} : vector<9x256xf32> to vector<1x256xf32>
    %81 = vector.broadcast %80 : vector<1x256xf32> to vector<4x256xf32>
    %82 = arith.mulf %79, %81 : vector<4x256xf32>
    %83 = vector.extract_strided_slice %0 {offsets = [8, 0, 0], sizes = [1, 8, 4], strides = [1, 1, 1]} : vector<9x8x4xbf16> to vector<1x8x4xbf16>
    %84 = vector.shape_cast %83 : vector<1x8x4xbf16> to vector<8x4xbf16>
    %85 = arith.truncf %82 : vector<4x256xf32> to vector<4x256xbf16>
    %cst_16 = arith.constant dense<0.000000e+00> : vector<8x256xf32>
    %86 = tpu.matmul %84, %85, %cst_16 {dimension_numbers = #tpu.dot_dimension_numbers<[1], [0], [0], [1], [0, 0, 1, 1], [], []>} : vector<8x4xbf16>, vector<4x256xbf16>, vector<8x256xf32> -> vector<8x256xf32>
    %87 = arith.addf %78, %86 : vector<8x256xf32>
    %cst_17 = arith.constant 0.000000e+00 : f32
    %88 = vector.broadcast %cst_17 : f32 to vector<8x256xf32>
    %89 = arith.maximumf %87, %88 : vector<8x256xf32>
    %90 = arith.truncf %89 : vector<8x256xf32> to vector<8x256xbf16>
    %c0_18 = arith.constant 0 : index
    %c0_19 = arith.constant 0 : index
    %c0_20 = arith.constant 0 : index
    %91 = vector.load %arg5[%c0_18, %c0_19, %c0_20] : memref<1x8x256xbf16, #tpu.memory_space<vmem>>, vector<1x8x256xbf16>
    %92 = vector.shape_cast %91 : vector<1x8x256xbf16> to vector<8x256xbf16>
    %93 = vector.shape_cast %90 : vector<8x256xbf16> to vector<1x8x256xbf16>
    tpu.vector_store %arg5[%c0_18, %c0_19, %c0_20], %93 {strides = array<i32>} : memref<1x8x256xbf16, #tpu.memory_space<vmem>>, vector<1x8x256xbf16>,
    return
  }
  func.func @transform_0(%arg0: i32) -> (i32, i32, i32) {
    %c0_i32 = arith.constant 0 : i32
    %c0_i32_0 = arith.constant 0 : i32
    %c0_i32_1 = arith.constant 0 : i32
    return %arg0, %c0_i32, %c0_i32_0 : i32, i32, i32
  }
  func.func @transform_1(%arg0: i32) -> (i32, i32, i32) {
    %c0_i32 = arith.constant 0 : i32
    %c0_i32_0 = arith.constant 0 : i32
    %c0_i32_1 = arith.constant 0 : i32
    %c0_i32_2 = arith.constant 0 : i32
    return %c0_i32, %c0_i32_0, %c0_i32_1 : i32, i32, i32
  }
  func.func @transform_2(%arg0: i32) -> (i32, i32) {
    %c0_i32 = arith.constant 0 : i32
    %c0_i32_0 = arith.constant 0 : i32
    %c0_i32_1 = arith.constant 0 : i32
    return %c0_i32, %c0_i32_0 : i32, i32
  }
  func.func @transform_3(%arg0: i32) -> (i32, i32) {
    %c0_i32 = arith.constant 0 : i32
    %c0_i32_0 = arith.constant 0 : i32
    %c0_i32_1 = arith.constant 0 : i32
    return %c0_i32, %c0_i32_0 : i32, i32
  }
  func.func @transform_4(%arg0: i32) -> (i32, i32, i32) {
    %c0_i32 = arith.constant 0 : i32
    %c0_i32_0 = arith.constant 0 : i32
    %c0_i32_1 = arith.constant 0 : i32
    return %arg0, %c0_i32, %c0_i32_0 : i32, i32, i32
  }
}

</mosaic_0001>

<llo_original>
// kernel: tpu_custom_call.1
$region0: #{tpu_custom_call.1}
  #allocation0 [shape = 'u32[]', space=smem, size = 0x4, offset = 0x4, fixed_abs, tag = 'smem constant byte address 0x4 - core index']
  #allocation1 [shape = 'u32[144,128]{1,0:T(1,128)}', space=vmem, size = 0x12000, scoped, tag = 'internal scratch']
  %s0 = inlined_call_operand.vmem [shape: f32[2,4,256], index: 0, kind: input, shape index: {}]
  %s1 = inlined_call_operand.vmem [shape: bf16[9,8,4], index: 1, kind: input, shape index: {}]
  %s2 = inlined_call_operand.vmem [shape: f32[9,256], index: 2, kind: input, shape index: {}]
  %s3 = inlined_call_operand.vmem [shape: f32[8,1], index: 3, kind: input, shape index: {}]
  %s4 = inlined_call_operand.hbm [shape: bf16[2,8,256], index: 4, kind: output, shape index: {}]
  %s5 = sld [smem:[#allocation0]]
  $region49: #{tpu_custom_call.1} parent=0
    _
  %s7 = ssub.s32 1, %s5
  %s8 = scalar_select 0, %s7, %s5
  $region1: #{tpu_custom_call.1} parent=0
    #allocation2 [shape = 'u8[8192]{0}', space=vmem, size = 0x2000, scoped, tag = 'output window, operand 0']
    #allocation3 [shape = 's32[2]{0}', space=sflag, size = 0x8, scoped, tag = 'scoped memory for tpu_custom_call.1']
    %9 = vsyncpa [#allocation3], 0
    %s10 = scalar_lea.sflag [#allocation3], 1
    %11 = vsyncpa %s10, 0
    loop: start=0, step=1, limit=4
    $region2: #{tpu_custom_call.1} parent=1 // loop_pre_header
      _
    $region3: #{tpu_custom_call.1} parent=1 // loop_header
      %s13 = sphi 0, %s17
      %p14 = scmp.ge.s32.totalorder %s13, 4
      %s23 = sphi 0, %s25
      %s26 = sphi 0, %s23
      %s27 = sphi 0, %s26
      %s43 = sphi 0, %s27
      %s47 = sphi 0, %s47
      %s49 = sphi 0, %s47
      %s50 = sphi 0, %s49
      %s64 = sphi 0, %s50
      %s68 = sphi 0, %s68
      %s70 = sphi 0, %s68
      %s71 = sphi 0, %s70
      %s85 = sphi 0, %s71
      %s89 = sphi 0, %s89
      %s91 = sphi 0, %s89
      %s92 = sphi 0, %s91
      %s106 = sphi 0, %s92
      %s112 = sphi 0, %s114
      %s115 = sphi 0, %s112
      %s116 = sphi 0, %s115
      %s132 = sphi 0, %s116
    $region4: #{tpu_custom_call.1} parent=1 // loop_header_branch
      %16 = sbr.rel (%p14) target = $region8
    $region5: #{tpu_custom_call.1} parent=1 // loop_body
      %s18 = ssub.s32 %s13, 1
      %s19 = ssub.s32 %s13, 2
      %s20 = sadd.s32 %s13, 1
      %s21 = ssub.s32 %s13, %s20
      %p22 = scmp.eq.s32.totalorder %s21, 0
      %s24 = sadd.s32 %s23, 1
      %s25 = scalar_select %p22, %s23, %s24
      %p28 = pneg %p22
      %p29 = scmp.eq.s32.totalorder %s13, 1
      %p30 = por %p28, %p29
      %p31 = scmp.ne.s32.totalorder %s23, %s26
      %p32 = scmp.eq.s32.totalorder %s13, 0
      %p33 = por %p31, %p32
      %p34 = scmp.ne.s32.totalorder %s23, %s26
      %p35 = scmp.eq.s32.totalorder %s18, 1
      %p36 = por %p34, %p35
      %p37 = scmp.ne.s32.totalorder %s26, %s27
      %p38 = scmp.eq.s32.totalorder %s18, 0
      %p39 = por %p37, %p38
      %p40 = scmp.ne.s32.totalorder %s26, %s27
      %p41 = scmp.eq.s32.totalorder %s19, 1
      %p42 = por %p40, %p41
      %p44 = scmp.ne.s32.totalorder %s27, %s43
      %p45 = scmp.eq.s32.totalorder %s19, 0
      %p46 = por %p44, %p45
      %s48 = sadd.s32 %s47, 1
      %p51 = scmp.eq.s32.totalorder %s13, 1
      %p52 = scmp.ne.s32.totalorder %s47, %s49
      %p53 = scmp.eq.s32.totalorder %s13, 0
      %p54 = por %p52, %p53
      %p55 = scmp.ne.s32.totalorder %s47, %s49
      %p56 = scmp.eq.s32.totalorder %s18, 1
      %p57 = por %p55, %p56
      %p58 = scmp.ne.s32.totalorder %s49, %s50
      %p59 = scmp.eq.s32.totalorder %s18, 0
      %p60 = por %p58, %p59
      %p61 = scmp.ne.s32.totalorder %s49, %s50
      %p62 = scmp.eq.s32.totalorder %s19, 1
      %p63 = por %p61, %p62
      %p65 = scmp.ne.s32.totalorder %s50, %s64
      %p66 = scmp.eq.s32.totalorder %s19, 0
      %p67 = por %p65, %p66
      %s69 = sadd.s32 %s68, 1
      %p72 = scmp.eq.s32.totalorder %s13, 1
      %p73 = scmp.ne.s32.totalorder %s68, %s70
      %p74 = scmp.eq.s32.totalorder %s13, 0
      %p75 = por %p73, %p74
      %p76 = scmp.ne.s32.totalorder %s68, %s70
      %p77 = scmp.eq.s32.totalorder %s18, 1
      %p78 = por %p76, %p77
      %p79 = scmp.ne.s32.totalorder %s70, %s71
      %p80 = scmp.eq.s32.totalorder %s18, 0
      %p81 = por %p79, %p80
      %p82 = scmp.ne.s32.totalorder %s70, %s71
      %p83 = scmp.eq.s32.totalorder %s19, 1
      %p84 = por %p82, %p83
      %p86 = scmp.ne.s32.totalorder %s71, %s85
      %p87 = scmp.eq.s32.totalorder %s19, 0
      %p88 = por %p86, %p87
      %s90 = sadd.s32 %s89, 1
      %p93 = scmp.eq.s32.totalorder %s13, 1
      %p94 = scmp.ne.s32.totalorder %s89, %s91
      %p95 = scmp.eq.s32.totalorder %s13, 0
      %p96 = por %p94, %p95
      %p97 = scmp.ne.s32.totalorder %s89, %s91
      %p98 = scmp.eq.s32.totalorder %s18, 1
      %p99 = por %p97, %p98
      %p100 = scmp.ne.s32.totalorder %s91, %s92
      %p101 = scmp.eq.s32.totalorder %s18, 0
      %p102 = por %p100, %p101
      %p103 = scmp.ne.s32.totalorder %s91, %s92
      %p104 = scmp.eq.s32.totalorder %s19, 1
      %p105 = por %p103, %p104
      %p107 = scmp.ne.s32.totalorder %s92, %s106
      %p108 = scmp.eq.s32.totalorder %s19, 0
      %p109 = por %p107, %p108
      %s110 = ssub.s32 %s13, %s20
      %p111 = scmp.eq.s32.totalorder %s110, 0
      %s113 = sadd.s32 %s112, 1
      %s114 = scalar_select %p111, %s112, %s113
      %p117 = pneg %p111
      %p118 = scmp.eq.s32.totalorder %s13, 1
      %p119 = por %p117, %p118
      %p120 = scmp.ne.s32.totalorder %s112, %s115
      %p121 = scmp.eq.s32.totalorder %s13, 0
      %p122 = por %p120, %p121
      %p123 = scmp.ne.s32.totalorder %s112, %s115
      %p124 = scmp.eq.s32.totalorder %s18, 1
      %p125 = por %p123, %p124
      %p126 = scmp.ne.s32.totalorder %s115, %s116
      %p127 = scmp.eq.s32.totalorder %s18, 0
      %p128 = por %p126, %p127
      %p129 = scmp.ne.s32.totalorder %s115, %s116
      %p130 = scmp.eq.s32.totalorder %s19, 1
      %p131 = por %p129, %p130
      %p133 = scmp.ne.s32.totalorder %s116, %s132
      %p134 = scmp.eq.s32.totalorder %s19, 0
      %p135 = por %p133, %p134
      %p136 = scmp.le.s32.totalorder 1, %s13
      %p137 = scmp.lt.s32.totalorder %s13, 3
      %p138 = pnand %p136, %p137
      %p139 = pneg %p138
      // Predicated region
      $region9: #{tpu_custom_call.1} parent=5 // pred_check
        _
      $region10: #{tpu_custom_call.1} parent=5 // pred_check_branch
        %141 = sbr.rel (%p138) target = $region12
      $region11: #{tpu_custom_call.1} parent=5 // pred_region
        %s142 = ssub.s32 %s13, 1
        // Predicated region
        $region13: #{tpu_custom_call.1} parent=11 // pred_check
          %p143 = pneg %p60
        $region14: #{tpu_custom_call.1} parent=11 // pred_check_branch
          %145 = sbr.rel (%p143) target = $region16
        $region15: #{tpu_custom_call.1} parent=11 // pred_region
          _
        $region16: #{tpu_custom_call.1} parent=11 // pred_fallthru
          _
        // Predicated region
        $region17: #{tpu_custom_call.1} parent=11 // pred_check
          %p146 = pneg %p81
        $region18: #{tpu_custom_call.1} parent=11 // pred_check_branch
          %148 = sbr.rel (%p146) target = $region20
        $region19: #{tpu_custom_call.1} parent=11 // pred_region
          _
        $region20: #{tpu_custom_call.1} parent=11 // pred_fallthru
          _
        // Predicated region
        $region21: #{tpu_custom_call.1} parent=11 // pred_check
          %p149 = pneg %p102
        $region22: #{tpu_custom_call.1} parent=11 // pred_check_branch
          %151 = sbr.rel (%p149) target = $region24
        $region23: #{tpu_custom_call.1} parent=11 // pred_region
          _
        $region24: #{tpu_custom_call.1} parent=11 // pred_fallthru
          _
      $region12: #{tpu_custom_call.1} parent=5 // pred_fallthru
        _
      %p152 = scmp.lt.s32.totalorder %s13, 2
      // Predicated region
      $region25: #{tpu_custom_call.1} parent=5 // pred_check
        %p153 = pneg %p152
      $region26: #{tpu_custom_call.1} parent=5 // pred_check_branch
        %155 = sbr.rel (%p153) target = $region28
      $region27: #{tpu_custom_call.1} parent=5 // pred_region
        // Predicated region
        $region29: #{tpu_custom_call.1} parent=27 // pred_check
          %p156 = pneg %p33
        $region30: #{tpu_custom_call.1} parent=27 // pred_check_branch
          %158 = sbr.rel (%p156) target = $region32
        $region31: #{tpu_custom_call.1} parent=27 // pred_region
          %p159 = scmp.lt.s32.totalorder %s13, 1
          %s160 = scalar_select %p159, %s13, 1
          %s161 = smul.addr %s160, 2
          %s162 = smul.addr %s161, 4
          %s163 = scalar_lea.vmem %s0, %s162
        $region32: #{tpu_custom_call.1} parent=27 // pred_fallthru
          _
      $region28: #{tpu_custom_call.1} parent=5 // pred_fallthru
        _
      %p164 = scmp.le.s32.totalorder 1, %s13
      %p165 = scmp.lt.s32.totalorder %s13, 3
      %p166 = pnand %p164, %p165
      %p167 = pneg %p166
      // Predicated region
      $region33: #{tpu_custom_call.1} parent=5 // pred_check
        _
      $region34: #{tpu_custom_call.1} parent=5 // pred_check_branch
        %169 = sbr.rel (%p166) target = $region36
      $region35: #{tpu_custom_call.1} parent=5 // pred_region
        %s170 = ssub.s32 %s13, 1
        %p171 = scmp.lt.s32.totalorder %s18, 1
        %s172 = scalar_select %p171, %s18, 1
        %s173 = smul.addr %s172, 2
        %s174 = smul.addr %s173, 4
        %s175 = scalar_lea.vmem %s0, %s174
        %p176 = pneg %p39
        %p177 = pneg %p36
        %p178 = pneg %p60
        %p179 = pneg %p57
        %p180 = pneg %p81
        %p181 = pneg %p78
        %p182 = pneg %p102
        %p183 = pneg %p99
        %p184 = pneg %p128
        %p185 = pneg %p125
        %s186 = sand.u32 %s115, 1
        %s187 = scalar_lea.sflag [#allocation3], %s186
        %s188 = sand.u32 %s115, 1
        %s189 = smul.addr %s188, 8
        %s190 = scalar_lea.vmem [#allocation2], %s189
        %p191 = scmp.lt.s32.totalorder %s18, 1
        %s192 = scalar_select %p191, %s18, 1
        %s193 = smul.addr %s192, 2
        %s194 = smul.addr %s193, 4
        %s195 = scalar_lea.vmem %s0, %s194
        %v197 = vld [vmem:[%s1] sm:$0xf]
        %v198 = vld [vmem:[%s1 + $0x4] sm:$0xf]
        %v199 = vld [vmem:[%s1 + $0x8] sm:$0xf]
        %v200 = vld [vmem:[%s1 + $0xc] sm:$0xf]
        %v201 = vld [vmem:[%s1 + $0x10] sm:$0xf]
        %v202 = vld [vmem:[%s1 + $0x14] sm:$0xf]
        %v203 = vld [vmem:[%s1 + $0x18] sm:$0xf]
        %v204 = vld [vmem:[%s1 + $0x1c] sm:$0xf]
        %v205 = vld [vmem:[%s1 + $0x20] sm:$0xf]
        %v206 = vld [vmem:[%s2] sm:$0xff]
        %v207 = vld [vmem:[%s2 + $0x8] sm:$0xff]
        %v208 = vld [vmem:[%s2 + $0x10] sm:$0x1]
        %v209 = vld [vmem:[%s2 + $0x18] sm:$0x1]
        %v210 = vld [vmem:[%s3] sm:$0xff]
        %212 = vset.pattern.permute.xlu0 0
        %213 = vperm.xlu0 %212, %v210
        %v214 = vpop.permute.xlu0 %213
        %v216 = vld [vmem:[%s195] sm:$0xff]
        %v218 = vcombine.high %v216, %v216
        %220 = vrot.lane.b32.xlu0 %v216, 17
        %v221 = vpop.permute.xlu0 %220
        %222 = vrot.lane.b32.xlu0 %v218, 17
        %v223 = vpop.permute.xlu0 %222
        %v224 = vlaneseq
        %v225 = vand.u32 %v224, 127
        %vm226 = vcmp.lt.s32.totalorder %v225, 17
        %v227 = vsel %vm226, %v221, %v223
        %v228 = vsel %vm226, %v223, %v221
        %v229 = vlaneseq
        %v230 = vshrl.u32 %v229, 7
        %v231 = vsub.s32 0, %v230
        %v232 = vrot.slane %v206, %v231
        %v233 = vlaneseq
        %v234 = vshrl.u32 %v233, 7
        %v235 = vsub.s32 0, %v234
        %v236 = vrot.slane %v207, %v235
        %v237 = vmul.f32 %v228, %v232
        %v238 = vmul.f32 %v227, %v236
        %v239 = vpack.c.bf16 %v237, %v237
        %v240 = vpack.c.bf16 %v238, %v238
        %vm241 = vcmask 31744
        %v243 = vsel %vm241, %v197, 0
        %vm245 = vcmask 1041408
        %v247 = vsel %vm245, %v239, 0
        %v250 = vsel %vm245, %v240, 0
        %252 = vmatprep.subr.bf16.mxu0 0
        %253 = vmatpush1.bf16.msra.mxu0 0
        %254 = vmatprep.subr.bf16.mxu0 0
        %255 = vmatpush1.bf16.msra.mxu0 0
        %256 = vmatprep.subr.bf16.mxu0 0
        %257 = vmatpush1.bf16.msra.mxu0 0
        %258 = vmatprep.subr.bf16.mxu0 0
        %259 = vmatpush1.bf16.msra.mxu0 0
        %260 = vmatprep.subr.bf16.mxu0 0
        %261 = vmatpush1.bf16.msra.mxu0 0
        %262 = vmatprep.subr.bf16.mxu0 0
        %263 = vmatpush1.bf16.msra.mxu0 0
        %264 = vmatprep.subr.bf16.mxu0 0
        %265 = vmatpush1.bf16.msra.mxu0 0
        %266 = vmatprep.subr.bf16.mxu0 %v250
        %267 = vmatpush1.bf16.msra.mxu0 %v247
        %268 = vmatprep.subr.bf16.mxu0 0
        %269 = vmatpush2.bf16.msra.mxu0 0
        %270 = vmatprep.subr.bf16.mxu0 0
        %271 = vmatpush2.bf16.msra.mxu0 0
        %272 = vmatprep.subr.bf16.mxu0 0
        %273 = vmatpush2.bf16.msra.mxu0 0
        %274 = vmatprep.subr.bf16.mxu0 0
        %275 = vmatpush2.bf16.msra.mxu0 0
        %276 = vmatprep.subr.bf16.mxu0 0
        %277 = vmatpush2.bf16.msra.mxu0 0
        %278 = vmatprep.subr.bf16.mxu0 0
        %279 = vmatpush2.bf16.msra.mxu0 0
        %280 = vmatprep.subr.bf16.mxu0 0
        %281 = vmatpush2.bf16.msra.mxu0 0
        %282 = vmatprep.subr.bf16.mxu0 0
        %283 = vmatpush2.bf16.msra.mxu0 0
        %284 = vmatprep.mubr.bf16.mxu0 0
        %285 = vmatmul.mubr.bf16.gmra.mxu0 %v243
        %v286 = vpop.f32.mrf.mxu0
        %v287 = vadd.f32 0.0, %v286
        %v288 = vpop.f32.mrf.mxu0
        %v289 = vadd.f32 0.0, %v288
        %v290 = vpop.f32.mrf.mxu0
        %v291 = vpop.f32.mrf.mxu0
        %292 = vdwg.mxu0
        %v293 = vadd.f32 %v214, %v287
        %v294 = vadd.f32 %v214, %v289
        %295 = vrot.lane.b32.xlu0 %v216, 16
        %v296 = vpop.permute.xlu0 %295
        %297 = vrot.lane.b32.xlu0 %v218, 16
        %v298 = vpop.permute.xlu0 %297
        %vm299 = vcmp.lt.s32.totalorder %v225, 16
        %v300 = vsel %vm299, %v296, %v298
        %v301 = vsel %vm299, %v298, %v296
        %v302 = vlaneseq
        %v303 = vshrl.u32 %v302, 7
        %v304 = vsub.s32 1, %v303
        %v305 = vrot.slane %v206, %v304
        %v306 = vlaneseq
        %v307 = vshrl.u32 %v306, 7
        %v308 = vsub.s32 1, %v307
        %v309 = vrot.slane %v207, %v308
        %v310 = vmul.f32 %v301, %v305
        %v311 = vmul.f32 %v300, %v309
        %v312 = vpack.c.bf16 %v310, %v310
        %v313 = vpack.c.bf16 %v311, %v311
        %v315 = vsel %vm241, %v198, 0
        %v318 = vsel %vm245, %v312, 0
        %v321 = vsel %vm245, %v313, 0
        %323 = vmatprep.subr.bf16.mxu0 0
        %324 = vmatpush1.bf16.msra.mxu0 0
        %325 = vmatprep.subr.bf16.mxu0 0
        %326 = vmatpush1.bf16.msra.mxu0 0
        %327 = vmatprep.subr.bf16.mxu0 0
        %328 = vmatpush1.bf16.msra.mxu0 0
        %329 = vmatprep.subr.bf16.mxu0 0
        %330 = vmatpush1.bf16.msra.mxu0 0
        %331 = vmatprep.subr.bf16.mxu0 0
        %332 = vmatpush1.bf16.msra.mxu0 0
        %333 = vmatprep.subr.bf16.mxu0 0
        %334 = vmatpush1.bf16.msra.mxu0 0
        %335 = vmatprep.subr.bf16.mxu0 0
        %336 = vmatpush1.bf16.msra.mxu0 0
        %337 = vmatprep.subr.bf16.mxu0 %v321
        %338 = vmatpush1.bf16.msra.mxu0 %v318
        %339 = vmatprep.subr.bf16.mxu0 0
        %340 = vmatpush2.bf16.msra.mxu0 0
        %341 = vmatprep.subr.bf16.mxu0 0
        %342 = vmatpush2.bf16.msra.mxu0 0
        %343 = vmatprep.subr.bf16.mxu0 0
        %344 = vmatpush2.bf16.msra.mxu0 0
        %345 = vmatprep.subr.bf16.mxu0 0
        %346 = vmatpush2.bf16.msra.mxu0 0
        %347 = vmatprep.subr.bf16.mxu0 0
        %348 = vmatpush2.bf16.msra.mxu0 0
        %349 = vmatprep.subr.bf16.mxu0 0
        %350 = vmatpush2.bf16.msra.mxu0 0
        %351 = vmatprep.subr.bf16.mxu0 0
        %352 = vmatpush2.bf16.msra.mxu0 0
        %353 = vmatprep.subr.bf16.mxu0 0
        %354 = vmatpush2.bf16.msra.mxu0 0
        %355 = vmatprep.mubr.bf16.mxu0 0
        %356 = vmatmul.mubr.bf16.gmra.mxu0 %v315
        %v357 = vpop.f32.mrf.mxu0
        %v358 = vadd.f32 0.0, %v357
        %v359 = vpop.f32.mrf.mxu0
        %v360 = vadd.f32 0.0, %v359
        %v361 = vpop.f32.mrf.mxu0
        %v362 = vpop.f32.mrf.mxu0
        %363 = vdwg.mxu0
        %v364 = vadd.f32 %v293, %v358
        %v365 = vadd.f32 %v294, %v360
        %366 = vrot.lane.b32.xlu0 %v216, 15
        %v367 = vpop.permute.xlu0 %366
        %368 = vrot.lane.b32.xlu0 %v218, 15
        %v369 = vpop.permute.xlu0 %368
        %vm370 = vcmp.lt.s32.totalorder %v225, 15
        %v371 = vsel %vm370, %v367, %v369
        %v372 = vsel %vm370, %v369, %v367
        %v373 = vlaneseq
        %v374 = vshrl.u32 %v373, 7
        %v375 = vsub.s32 2, %v374
        %v376 = vrot.slane %v206, %v375
        %v377 = vlaneseq
        %v378 = vshrl.u32 %v377, 7
        %v379 = vsub.s32 2, %v378
        %v380 = vrot.slane %v207, %v379
        %v381 = vmul.f32 %v372, %v376
        %v382 = vmul.f32 %v371, %v380
        %v383 = vpack.c.bf16 %v381, %v381
        %v384 = vpack.c.bf16 %v382, %v382
        %v386 = vsel %vm241, %v199, 0
        %v389 = vsel %vm245, %v383, 0
        %v392 = vsel %vm245, %v384, 0
        %394 = vmatprep.subr.bf16.mxu0 0
        %395 = vmatpush1.bf16.msra.mxu0 0
        %396 = vmatprep.subr.bf16.mxu0 0
        %397 = vmatpush1.bf16.msra.mxu0 0
        %398 = vmatprep.subr.bf16.mxu0 0
        %399 = vmatpush1.bf16.msra.mxu0 0
        %400 = vmatprep.subr.bf16.mxu0 0
        %401 = vmatpush1.bf16.msra.mxu0 0
        %402 = vmatprep.subr.bf16.mxu0 0
        %403 = vmatpush1.bf16.msra.mxu0 0
        %404 = vmatprep.subr.bf16.mxu0 0
        %405 = vmatpush1.bf16.msra.mxu0 0
        %406 = vmatprep.subr.bf16.mxu0 0
        %407 = vmatpush1.bf16.msra.mxu0 0
        %408 = vmatprep.subr.bf16.mxu0 %v392
        %409 = vmatpush1.bf16.msra.mxu0 %v389
        %410 = vmatprep.subr.bf16.mxu0 0
        %411 = vmatpush2.bf16.msra.mxu0 0
        %412 = vmatprep.subr.bf16.mxu0 0
        %413 = vmatpush2.bf16.msra.mxu0 0
        %414 = vmatprep.subr.bf16.mxu0 0
        %415 = vmatpush2.bf16.msra.mxu0 0
        %416 = vmatprep.subr.bf16.mxu0 0
        %417 = vmatpush2.bf16.msra.mxu0 0
        %418 = vmatprep.subr.bf16.mxu0 0
        %419 = vmatpush2.bf16.msra.mxu0 0
        %420 = vmatprep.subr.bf16.mxu0 0
        %421 = vmatpush2.bf16.msra.mxu0 0
        %422 = vmatprep.subr.bf16.mxu0 0
        %423 = vmatpush2.bf16.msra.mxu0 0
        %424 = vmatprep.subr.bf16.mxu0 0
        %425 = vmatpush2.bf16.msra.mxu0 0
        %426 = vmatprep.mubr.bf16.mxu0 0
        %427 = vmatmul.mubr.bf16.gmra.mxu0 %v386
        %v428 = vpop.f32.mrf.mxu0
        %v429 = vadd.f32 0.0, %v428
        %v430 = vpop.f32.mrf.mxu0
        %v431 = vadd.f32 0.0, %v430
        %v432 = vpop.f32.mrf.mxu0
        %v433 = vpop.f32.mrf.mxu0
        %434 = vdwg.mxu0
        %v435 = vadd.f32 %v364, %v429
        %v436 = vadd.f32 %v365, %v431
        %437 = vrot.lane.b32.xlu0 %v216, 1
        %v438 = vpop.permute.xlu0 %437
        %439 = vrot.lane.b32.xlu0 %v218, 1
        %v440 = vpop.permute.xlu0 %439
        %vm441 = vcmp.lt.s32.totalorder %v225, 1
        %v442 = vsel %vm441, %v438, %v440
        %v443 = vsel %vm441, %v440, %v438
        %v444 = vlaneseq
        %v445 = vshrl.u32 %v444, 7
        %v446 = vsub.s32 3, %v445
        %v447 = vrot.slane %v206, %v446
        %v448 = vlaneseq
        %v449 = vshrl.u32 %v448, 7
        %v450 = vsub.s32 3, %v449
        %v451 = vrot.slane %v207, %v450
        %v452 = vmul.f32 %v443, %v447
        %v453 = vmul.f32 %v442, %v451
        %v454 = vpack.c.bf16 %v452, %v452
        %v455 = vpack.c.bf16 %v453, %v453
        %v457 = vsel %vm241, %v200, 0
        %v460 = vsel %vm245, %v454, 0
        %v463 = vsel %vm245, %v455, 0
        %465 = vmatprep.subr.bf16.mxu0 0
        %466 = vmatpush1.bf16.msra.mxu0 0
        %467 = vmatprep.subr.bf16.mxu0 0
        %468 = vmatpush1.bf16.msra.mxu0 0
        %469 = vmatprep.subr.bf16.mxu0 0
        %470 = vmatpush1.bf16.msra.mxu0 0
        %471 = vmatprep.subr.bf16.mxu0 0
        %472 = vmatpush1.bf16.msra.mxu0 0
        %473 = vmatprep.subr.bf16.mxu0 0
        %474 = vmatpush1.bf16.msra.mxu0 0
        %475 = vmatprep.subr.bf16.mxu0 0
        %476 = vmatpush1.bf16.msra.mxu0 0
        %477 = vmatprep.subr.bf16.mxu0 0
        %478 = vmatpush1.bf16.msra.mxu0 0
        %479 = vmatprep.subr.bf16.mxu0 %v463
        %480 = vmatpush1.bf16.msra.mxu0 %v460
        %481 = vmatprep.subr.bf16.mxu0 0
        %482 = vmatpush2.bf16.msra.mxu0 0
        %483 = vmatprep.subr.bf16.mxu0 0
        %484 = vmatpush2.bf16.msra.mxu0 0
        %485 = vmatprep.subr.bf16.mxu0 0
        %486 = vmatpush2.bf16.msra.mxu0 0
        %487 = vmatprep.subr.bf16.mxu0 0
        %488 = vmatpush2.bf16.msra.mxu0 0
        %489 = vmatprep.subr.bf16.mxu0 0
        %490 = vmatpush2.bf16.msra.mxu0 0
        %491 = vmatprep.subr.bf16.mxu0 0
        %492 = vmatpush2.bf16.msra.mxu0 0
        %493 = vmatprep.subr.bf16.mxu0 0
        %494 = vmatpush2.bf16.msra.mxu0 0
        %495 = vmatprep.subr.bf16.mxu0 0
        %496 = vmatpush2.bf16.msra.mxu0 0
        %497 = vmatprep.mubr.bf16.mxu0 0
        %498 = vmatmul.mubr.bf16.gmra.mxu0 %v457
        %v499 = vpop.f32.mrf.mxu0
        %v500 = vadd.f32 0.0, %v499
        %v501 = vpop.f32.mrf.mxu0
        %v502 = vadd.f32 0.0, %v501
        %v503 = vpop.f32.mrf.mxu0
        %v504 = vpop.f32.mrf.mxu0
        %505 = vdwg.mxu0
        %v506 = vadd.f32 %v435, %v500
        %v507 = vadd.f32 %v436, %v502
        %v508 = vlaneseq
        %v509 = vshrl.u32 %v508, 7
        %v510 = vsub.s32 4, %v509
        %v511 = vrot.slane %v206, %v510
        %v512 = vlaneseq
        %v513 = vshrl.u32 %v512, 7
        %v514 = vsub.s32 4, %v513
        %v515 = vrot.slane %v207, %v514
        %v516 = vmul.f32 %v216, %v511
        %v517 = vmul.f32 %v218, %v515
        %v518 = vpack.c.bf16 %v516, %v516
        %v519 = vpack.c.bf16 %v517, %v517
        %v521 = vsel %vm241, %v201, 0
        %v524 = vsel %vm245, %v518, 0
        %v527 = vsel %vm245, %v519, 0
        %529 = vmatprep.subr.bf16.mxu0 0
        %530 = vmatpush1.bf16.msra.mxu0 0
        %531 = vmatprep.subr.bf16.mxu0 0
        %532 = vmatpush1.bf16.msra.mxu0 0
        %533 = vmatprep.subr.bf16.mxu0 0
        %534 = vmatpush1.bf16.msra.mxu0 0
        %535 = vmatprep.subr.bf16.mxu0 0
        %536 = vmatpush1.bf16.msra.mxu0 0
        %537 = vmatprep.subr.bf16.mxu0 0
        %538 = vmatpush1.bf16.msra.mxu0 0
        %539 = vmatprep.subr.bf16.mxu0 0
        %540 = vmatpush1.bf16.msra.mxu0 0
        %541 = vmatprep.subr.bf16.mxu0 0
        %542 = vmatpush1.bf16.msra.mxu0 0
        %543 = vmatprep.subr.bf16.mxu0 %v527
        %544 = vmatpush1.bf16.msra.mxu0 %v524
        %545 = vmatprep.subr.bf16.mxu0 0
        %546 = vmatpush2.bf16.msra.mxu0 0
        %547 = vmatprep.subr.bf16.mxu0 0
        %548 = vmatpush2.bf16.msra.mxu0 0
        %549 = vmatprep.subr.bf16.mxu0 0
        %550 = vmatpush2.bf16.msra.mxu0 0
        %551 = vmatprep.subr.bf16.mxu0 0
        %552 = vmatpush2.bf16.msra.mxu0 0
        %553 = vmatprep.subr.bf16.mxu0 0
        %554 = vmatpush2.bf16.msra.mxu0 0
        %555 = vmatprep.subr.bf16.mxu0 0
        %556 = vmatpush2.bf16.msra.mxu0 0
        %557 = vmatprep.subr.bf16.mxu0 0
        %558 = vmatpush2.bf16.msra.mxu0 0
        %559 = vmatprep.subr.bf16.mxu0 0
        %560 = vmatpush2.bf16.msra.mxu0 0
        %561 = vmatprep.mubr.bf16.mxu0 0
        %562 = vmatmul.mubr.bf16.gmra.mxu0 %v521
        %v563 = vpop.f32.mrf.mxu0
        %v564 = vadd.f32 0.0, %v563
        %v565 = vpop.f32.mrf.mxu0
        %v566 = vadd.f32 0.0, %v565
        %v567 = vpop.f32.mrf.mxu0
        %v568 = vpop.f32.mrf.mxu0
        %569 = vdwg.mxu0
        %v570 = vadd.f32 %v506, %v564
        %v571 = vadd.f32 %v507, %v566
        %572 = vrot.lane.b32.xlu0 %v216, 127
        %v573 = vpop.permute.xlu0 %572
        %574 = vrot.lane.b32.xlu0 %v218, 127
        %v575 = vpop.permute.xlu0 %574
        %vm576 = vcmp.lt.s32.totalorder %v225, 127
        %v577 = vsel %vm576, %v573, %v575
        %v578 = vsel %vm576, %v575, %v573
        %v579 = vlaneseq
        %v580 = vshrl.u32 %v579, 7
        %v581 = vsub.s32 5, %v580
        %v582 = vrot.slane %v206, %v581
        %v583 = vlaneseq
        %v584 = vshrl.u32 %v583, 7
        %v585 = vsub.s32 5, %v584
        %v586 = vrot.slane %v207, %v585
        %v587 = vmul.f32 %v577, %v582
        %v588 = vmul.f32 %v578, %v586
        %v589 = vpack.c.bf16 %v587, %v587
        %v590 = vpack.c.bf16 %v588, %v588
        %v592 = vsel %vm241, %v202, 0
        %v595 = vsel %vm245, %v589, 0
        %v598 = vsel %vm245, %v590, 0
        %600 = vmatprep.subr.bf16.mxu0 0
        %601 = vmatpush1.bf16.msra.mxu0 0
        %602 = vmatprep.subr.bf16.mxu0 0
        %603 = vmatpush1.bf16.msra.mxu0 0
        %604 = vmatprep.subr.bf16.mxu0 0
        %605 = vmatpush1.bf16.msra.mxu0 0
        %606 = vmatprep.subr.bf16.mxu0 0
        %607 = vmatpush1.bf16.msra.mxu0 0
        %608 = vmatprep.subr.bf16.mxu0 0
        %609 = vmatpush1.bf16.msra.mxu0 0
        %610 = vmatprep.subr.bf16.mxu0 0
        %611 = vmatpush1.bf16.msra.mxu0 0
        %612 = vmatprep.subr.bf16.mxu0 0
        %613 = vmatpush1.bf16.msra.mxu0 0
        %614 = vmatprep.subr.bf16.mxu0 %v598
        %615 = vmatpush1.bf16.msra.mxu0 %v595
        %616 = vmatprep.subr.bf16.mxu0 0
        %617 = vmatpush2.bf16.msra.mxu0 0
        %618 = vmatprep.subr.bf16.mxu0 0
        %619 = vmatpush2.bf16.msra.mxu0 0
        %620 = vmatprep.subr.bf16.mxu0 0
        %621 = vmatpush2.bf16.msra.mxu0 0
        %622 = vmatprep.subr.bf16.mxu0 0
        %623 = vmatpush2.bf16.msra.mxu0 0
        %624 = vmatprep.subr.bf16.mxu0 0
        %625 = vmatpush2.bf16.msra.mxu0 0
        %626 = vmatprep.subr.bf16.mxu0 0
        %627 = vmatpush2.bf16.msra.mxu0 0
        %628 = vmatprep.subr.bf16.mxu0 0
        %629 = vmatpush2.bf16.msra.mxu0 0
        %630 = vmatprep.subr.bf16.mxu0 0
        %631 = vmatpush2.bf16.msra.mxu0 0
        %632 = vmatprep.mubr.bf16.mxu0 0
        %633 = vmatmul.mubr.bf16.gmra.mxu0 %v592
        %v634 = vpop.f32.mrf.mxu0
        %v635 = vadd.f32 0.0, %v634
        %v636 = vpop.f32.mrf.mxu0
        %v637 = vadd.f32 0.0, %v636
        %v638 = vpop.f32.mrf.mxu0
        %v639 = vpop.f32.mrf.mxu0
        %640 = vdwg.mxu0
        %v641 = vadd.f32 %v570, %v635
        %v642 = vadd.f32 %v571, %v637
        %643 = vrot.lane.b32.xlu0 %v216, 113
        %v644 = vpop.permute.xlu0 %643
        %645 = vrot.lane.b32.xlu0 %v218, 113
        %v646 = vpop.permute.xlu0 %645
        %vm647 = vcmp.lt.s32.totalorder %v225, 113
        %v648 = vsel %vm647, %v644, %v646
        %v649 = vsel %vm647, %v646, %v644
        %v650 = vlaneseq
        %v651 = vshrl.u32 %v650, 7
        %v652 = vsub.s32 6, %v651
        %v653 = vrot.slane %v206, %v652
        %v654 = vlaneseq
        %v655 = vshrl.u32 %v654, 7
        %v656 = vsub.s32 6, %v655
        %v657 = vrot.slane %v207, %v656
        %v658 = vmul.f32 %v648, %v653
        %v659 = vmul.f32 %v649, %v657
        %v660 = vpack.c.bf16 %v658, %v658
        %v661 = vpack.c.bf16 %v659, %v659
        %v663 = vsel %vm241, %v203, 0
        %v666 = vsel %vm245, %v660, 0
        %v669 = vsel %vm245, %v661, 0
        %671 = vmatprep.subr.bf16.mxu0 0
        %672 = vmatpush1.bf16.msra.mxu0 0
        %673 = vmatprep.subr.bf16.mxu0 0
        %674 = vmatpush1.bf16.msra.mxu0 0
        %675 = vmatprep.subr.bf16.mxu0 0
        %676 = vmatpush1.bf16.msra.mxu0 0
        %677 = vmatprep.subr.bf16.mxu0 0
        %678 = vmatpush1.bf16.msra.mxu0 0
        %679 = vmatprep.subr.bf16.mxu0 0
        %680 = vmatpush1.bf16.msra.mxu0 0
        %681 = vmatprep.subr.bf16.mxu0 0
        %682 = vmatpush1.bf16.msra.mxu0 0
        %683 = vmatprep.subr.bf16.mxu0 0
        %684 = vmatpush1.bf16.msra.mxu0 0
        %685 = vmatprep.subr.bf16.mxu0 %v669
        %686 = vmatpush1.bf16.msra.mxu0 %v666
        %687 = vmatprep.subr.bf16.mxu0 0
        %688 = vmatpush2.bf16.msra.mxu0 0
        %689 = vmatprep.subr.bf16.mxu0 0
        %690 = vmatpush2.bf16.msra.mxu0 0
        %691 = vmatprep.subr.bf16.mxu0 0
        %692 = vmatpush2.bf16.msra.mxu0 0
        %693 = vmatprep.subr.bf16.mxu0 0
        %694 = vmatpush2.bf16.msra.mxu0 0
        %695 = vmatprep.subr.bf16.mxu0 0
        %696 = vmatpush2.bf16.msra.mxu0 0
        %697 = vmatprep.subr.bf16.mxu0 0
        %698 = vmatpush2.bf16.msra.mxu0 0
        %699 = vmatprep.subr.bf16.mxu0 0
        %700 = vmatpush2.bf16.msra.mxu0 0
        %701 = vmatprep.subr.bf16.mxu0 0
        %702 = vmatpush2.bf16.msra.mxu0 0
        %703 = vmatprep.mubr.bf16.mxu0 0
        %704 = vmatmul.mubr.bf16.gmra.mxu0 %v663
        %v705 = vpop.f32.mrf.mxu0
        %v706 = vadd.f32 0.0, %v705
        %v707 = vpop.f32.mrf.mxu0
        %v708 = vadd.f32 0.0, %v707
        %v709 = vpop.f32.mrf.mxu0
        %v710 = vpop.f32.mrf.mxu0
        %711 = vdwg.mxu0
        %v712 = vadd.f32 %v641, %v706
        %v713 = vadd.f32 %v642, %v708
        %714 = vrot.lane.b32.xlu0 %v216, 112
        %v715 = vpop.permute.xlu0 %714
        %716 = vrot.lane.b32.xlu0 %v218, 112
        %v717 = vpop.permute.xlu0 %716
        %vm718 = vcmp.lt.s32.totalorder %v225, 112
        %v719 = vsel %vm718, %v715, %v717
        %v720 = vsel %vm718, %v717, %v715
        %v721 = vlaneseq
        %v722 = vshrl.u32 %v721, 7
        %v723 = vsub.s32 7, %v722
        %v724 = vrot.slane %v206, %v723
        %v725 = vlaneseq
        %v726 = vshrl.u32 %v725, 7
        %v727 = vsub.s32 7, %v726
        %v728 = vrot.slane %v207, %v727
        %v729 = vmul.f32 %v719, %v724
        %v730 = vmul.f32 %v720, %v728
        %v731 = vpack.c.bf16 %v729, %v729
        %v732 = vpack.c.bf16 %v730, %v730
        %v734 = vsel %vm241, %v204, 0
        %v737 = vsel %vm245, %v731, 0
        %v740 = vsel %vm245, %v732, 0
        %742 = vmatprep.subr.bf16.mxu0 0
        %743 = vmatpush1.bf16.msra.mxu0 0
        %744 = vmatprep.subr.bf16.mxu0 0
        %745 = vmatpush1.bf16.msra.mxu0 0
        %746 = vmatprep.subr.bf16.mxu0 0
        %747 = vmatpush1.bf16.msra.mxu0 0
        %748 = vmatprep.subr.bf16.mxu0 0
        %749 = vmatpush1.bf16.msra.mxu0 0
        %750 = vmatprep.subr.bf16.mxu0 0
        %751 = vmatpush1.bf16.msra.mxu0 0
        %752 = vmatprep.subr.bf16.mxu0 0
        %753 = vmatpush1.bf16.msra.mxu0 0
        %754 = vmatprep.subr.bf16.mxu0 0
        %755 = vmatpush1.bf16.msra.mxu0 0
        %756 = vmatprep.subr.bf16.mxu0 %v740
        %757 = vmatpush1.bf16.msra.mxu0 %v737
        %758 = vmatprep.subr.bf16.mxu0 0
        %759 = vmatpush2.bf16.msra.mxu0 0
        %760 = vmatprep.subr.bf16.mxu0 0
        %761 = vmatpush2.bf16.msra.mxu0 0
        %762 = vmatprep.subr.bf16.mxu0 0
        %763 = vmatpush2.bf16.msra.mxu0 0
        %764 = vmatprep.subr.bf16.mxu0 0
        %765 = vmatpush2.bf16.msra.mxu0 0
        %766 = vmatprep.subr.bf16.mxu0 0
        %767 = vmatpush2.bf16.msra.mxu0 0
        %768 = vmatprep.subr.bf16.mxu0 0
        %769 = vmatpush2.bf16.msra.mxu0 0
        %770 = vmatprep.subr.bf16.mxu0 0
        %771 = vmatpush2.bf16.msra.mxu0 0
        %772 = vmatprep.subr.bf16.mxu0 0
        %773 = vmatpush2.bf16.msra.mxu0 0
        %774 = vmatprep.mubr.bf16.mxu0 0
        %775 = vmatmul.mubr.bf16.gmra.mxu0 %v734
        %v776 = vpop.f32.mrf.mxu0
        %v777 = vadd.f32 0.0, %v776
        %v778 = vpop.f32.mrf.mxu0
        %v779 = vadd.f32 0.0, %v778
        %v780 = vpop.f32.mrf.mxu0
        %v781 = vpop.f32.mrf.mxu0
        %782 = vdwg.mxu0
        %v783 = vadd.f32 %v712, %v777
        %v784 = vadd.f32 %v713, %v779
        %785 = vrot.lane.b32.xlu0 %v216, 111
        %v786 = vpop.permute.xlu0 %785
        %787 = vrot.lane.b32.xlu0 %v218, 111
        %v788 = vpop.permute.xlu0 %787
        %vm789 = vcmp.lt.s32.totalorder %v225, 111
        %v790 = vsel %vm789, %v786, %v788
        %v791 = vsel %vm789, %v788, %v786
        %v792 = vlaneseq
        %v793 = vshrl.u32 %v792, 7
        %v794 = vsub.s32 0, %v793
        %v795 = vrot.slane %v208, %v794
        %v796 = vlaneseq
        %v797 = vshrl.u32 %v796, 7
        %v798 = vsub.s32 0, %v797
        %v799 = vrot.slane %v209, %v798
        %v800 = vmul.f32 %v790, %v795
        %v801 = vmul.f32 %v791, %v799
        %v802 = vpack.c.bf16 %v800, %v800
        %v803 = vpack.c.bf16 %v801, %v801
        %v805 = vsel %vm241, %v205, 0
        %v808 = vsel %vm245, %v802, 0
        %v811 = vsel %vm245, %v803, 0
        %813 = vmatprep.subr.bf16.mxu0 0
        %814 = vmatpush1.bf16.msra.mxu0 0
        %815 = vmatprep.subr.bf16.mxu0 0
        %816 = vmatpush1.bf16.msra.mxu0 0
        %817 = vmatprep.subr.bf16.mxu0 0
        %818 = vmatpush1.bf16.msra.mxu0 0
        %819 = vmatprep.subr.bf16.mxu0 0
        %820 = vmatpush1.bf16.msra.mxu0 0
        %821 = vmatprep.subr.bf16.mxu0 0
        %822 = vmatpush1.bf16.msra.mxu0 0
        %823 = vmatprep.subr.bf16.mxu0 0
        %824 = vmatpush1.bf16.msra.mxu0 0
        %825 = vmatprep.subr.bf16.mxu0 0
        %826 = vmatpush1.bf16.msra.mxu0 0
        %827 = vmatprep.subr.bf16.mxu0 %v811
        %828 = vmatpush1.bf16.msra.mxu0 %v808
        %829 = vmatprep.subr.bf16.mxu0 0
        %830 = vmatpush2.bf16.msra.mxu0 0
        %831 = vmatprep.subr.bf16.mxu0 0
        %832 = vmatpush2.bf16.msra.mxu0 0
        %833 = vmatprep.subr.bf16.mxu0 0
        %834 = vmatpush2.bf16.msra.mxu0 0
        %835 = vmatprep.subr.bf16.mxu0 0
        %836 = vmatpush2.bf16.msra.mxu0 0
        %837 = vmatprep.subr.bf16.mxu0 0
        %838 = vmatpush2.bf16.msra.mxu0 0
        %839 = vmatprep.subr.bf16.mxu0 0
        %840 = vmatpush2.bf16.msra.mxu0 0
        %841 = vmatprep.subr.bf16.mxu0 0
        %842 = vmatpush2.bf16.msra.mxu0 0
        %843 = vmatprep.subr.bf16.mxu0 0
        %844 = vmatpush2.bf16.msra.mxu0 0
        %845 = vmatprep.mubr.bf16.mxu0 0
        %846 = vmatmul.mubr.bf16.gmra.mxu0 %v805
        %v847 = vpop.f32.mrf.mxu0
        %v848 = vadd.f32 0.0, %v847
        %v849 = vpop.f32.mrf.mxu0
        %v850 = vadd.f32 0.0, %v849
        %v851 = vpop.f32.mrf.mxu0
        %v852 = vpop.f32.mrf.mxu0
        %853 = vdwg.mxu0
        %v854 = vadd.f32 %v783, %v848
        %v855 = vadd.f32 %v784, %v850
        %v856 = vmax.f32 %v854, 0.0
        %v857 = vmax.f32 %v855, 0.0
        %v858 = vpack.c.bf16 %v856, %v856
        %v859 = vpack.c.bf16 %v857, %v857
        %v862 = vunpack.c.l.b16 %v858
        %v863 = vunpack.c.l.b16 %v859
        %v864 = vpack.c.b16 %v863, %v862
        %866 = vst [vmem:[%s190] sm:$0xff] %v864
        %s867 = sand.u32 %s115, 1
        %s868 = scalar_lea.sflag [#allocation3], %s867
        %s869 = sand.u32 %s115, 1
        %s870 = smul.addr %s869, 8
        %s871 = scalar_lea.vmem [#allocation2], %s870
        // Predicated region
        $region37: #{tpu_custom_call.1} parent=35 // pred_check
          %p872 = pneg %p125
        $region38: #{tpu_custom_call.1} parent=35 // pred_check_branch
          %874 = sbr.rel (%p872) target = $region40
        $region39: #{tpu_custom_call.1} parent=35 // pred_region
          %s876 = ssub.s32 128, 128
          %877 = vsyncadd %s868, %s876
          %s878 = smul.addr %s18, 2
          %s879 = smul.addr %s878, 64
          %s880 = scalar_lea.hbm %s4, %s879
          %s882 = sshll.u32 %s871, 4
          %s883 = int_to_ptr.vmem [resolvable:$true] %s882
          %885 = dma.vmem_to_hbm [thread:$0]  %s883, 128, %s880, %s868
        $region40: #{tpu_custom_call.1} parent=35 // pred_fallthru
          _
      $region36: #{tpu_custom_call.1} parent=5 // pred_fallthru
        _
      %p886 = scmp.le.s32.totalorder 2, %s13
      // Predicated region
      $region41: #{tpu_custom_call.1} parent=5 // pred_check
        %p887 = pneg %p886
      $region42: #{tpu_custom_call.1} parent=5 // pred_check_branch
        %889 = sbr.rel (%p887) target = $region44
      $region43: #{tpu_custom_call.1} parent=5 // pred_region
        %s890 = ssub.s32 %s13, 2
        // Predicated region
        $region45: #{tpu_custom_call.1} parent=43 // pred_check
          %p891 = pneg %p131
        $region46: #{tpu_custom_call.1} parent=43 // pred_check_branch
          %893 = sbr.rel (%p891) target = $region48
        $region47: #{tpu_custom_call.1} parent=43 // pred_region
          %s894 = sand.u32 %s116, 1
          %s895 = scalar_lea.sflag [#allocation3], %s894
          %s896 = sand.u32 %s116, 1
          %s897 = smul.addr %s896, 8
          %s898 = scalar_lea.vmem [#allocation2], %s897
          %899 = dma.done %s895, 128
        $region48: #{tpu_custom_call.1} parent=43 // pred_fallthru
          _
      $region44: #{tpu_custom_call.1} parent=5 // pred_fallthru
        _
    $region6: #{tpu_custom_call.1} parent=1 // loop_footer
      %s17 = sadd.s32 1, %s13
    $region7: #{tpu_custom_call.1} parent=1 // loop_footer_branch
      %12 = sbr.rel target = $region3
    $region8: #{tpu_custom_call.1} parent=1 // loop_exit
      _
    %900 = vsyncpa [#allocation3], 1
    %s901 = scalar_lea.sflag [#allocation3], 1
    %902 = vsyncpa %s901, 1

</llo_original>
